<compile_context>
chip_gen: v7x
topology: tpu7x:2x2x1
jax: 0.10.0
libtpu: 0.0.40
codegen_flags: <defaults>
</compile_context>

<pallas_src>
import functools

import jax
import jax.numpy as jnp
from jax.experimental import pallas as pl
from jax.experimental.pallas import tpu as pltpu


# ----------------------------- small helpers --------------------------------

def _round_up(x, m):
    return ((x + m - 1) // m) * m


def _round_down(x, m):
    return (x // m) * m


def _sublane_align(dtype):
    # Minimum second-to-last block multiple: 8 (4-byte), 16 (2-byte), 32 (1-byte).
    return {4: 8, 2: 16, 1: 32}[jnp.dtype(dtype).itemsize]


def _vmem_budget_bytes():
    """Per-generation VMEM budget: ~3/4 of physical, leaving Mosaic headroom.

    v7x (64 MiB / TensorCore) -> 48 MiB; v5e/v6e (128 MiB) -> 96 MiB.
    Falls back to the most conservative value if the query is unavailable.
    """
    phys = None
    try:
        info = pltpu.get_tpu_info()
        for name in ("vmem_capacity_bytes", "vmem_size_bytes", "vmem_bytes"):
            val = getattr(info, name, None)
            if val:
                phys = int(val)
                break
    except Exception:
        phys = None
    if not phys:
        phys = 64 * 1024 * 1024          # conservative (v7x per-TC physical)
    return (phys * 3) // 4


def _pick_col_tile(hidden, bytes_w, weight_budget, col_tile):
    """Weight N-tile: full hidden if the (single-buffered) weight fits, else the
    largest multiple-of-128 divisor whose double-buffered blocks fit."""
    if col_tile is not None:
        assert hidden % col_tile == 0 and (col_tile == hidden or col_tile % 128 == 0)
        return col_tile
    if hidden * hidden * bytes_w <= weight_budget:
        return hidden
    if hidden % 128 != 0:
        return hidden                    # cannot tile the lane dim cleanly
    tn = max(128, _round_down(hidden // 2, 128))
    while tn > 128 and (hidden % tn != 0 or 2 * hidden * tn * bytes_w > weight_budget):
        tn -= 128
    return max(tn, 128)


# --------------------------------- kernel ------------------------------------

def _sublayer_connection_kernel(*refs, eps, approx_recip, split_residual):
    if split_residual:
        x_ref, xcol_ref, w_ref, b_ref, o_ref, z_ref = refs
    else:
        x_ref, w_ref, b_ref, o_ref = refs
        xcol_ref = x_ref

    def layernorm():
        xf = x_ref[...].astype(jnp.float32)                          # (rt, H) f32
        h = xf.shape[-1]
        mean = jnp.mean(xf, axis=-1, keepdims=True)
        centered = xf - mean
        var_unb = jnp.sum(centered * centered, axis=-1, keepdims=True) * (1.0 / (h - 1))
        std = jnp.sqrt(var_unb)                                      # torch unbiased std
        inv = (pl.reciprocal(std + eps, approx=True) if approx_recip
               else 1.0 / (std + eps))                               # EUP slot when approx
        return centered * inv          # gamma/beta are folded into w_ref / b_ref

    if split_residual:
        # Column-tiled weight: compute LN once per row tile (j == 0) and carry
        # the normalized activation across the column axis in a VMEM scratch.
        @pl.when(pl.program_id(1) == 0)
        def _():
            z_ref[...] = layernorm().astype(z_ref.dtype)
        z = z_ref[...]
    else:
        z = layernorm().astype(w_ref.dtype)

    # sublayer: dense projection on the MXU with f32 accumulation.
    sub = jnp.dot(z, w_ref[...], preferred_element_type=jnp.float32) + b_ref[...]

    # dropout (identity in eval mode) + residual.
    o_ref[...] = (xcol_ref[...].astype(jnp.float32) + sub).astype(o_ref.dtype)


# -------------------------------- wrapper ------------------------------------

def sublayer_connection(x, gamma, beta, w, b, *, eps: float = 1e-6,
                        matmul_dtype=jnp.bfloat16, approx_recip: bool = True,
                        row_tile: int | None = None, col_tile: int | None = None,
                        target_row_tile_bytes: int = 4 * 1024 * 1024):
    orig_shape = x.shape
    hidden = orig_shape[-1]
    x2d = x.reshape(-1, hidden)
    rows = x2d.shape[0]

    # ---- fold the LayerNorm affine into the projection (trace time) ---------
    gamma32 = gamma.astype(jnp.float32)
    beta32 = beta.astype(jnp.float32)
    w32 = w.astype(jnp.float32)
    b32 = b.astype(jnp.float32)
    w_eff = (gamma32[:, None] * w32).astype(matmul_dtype)            # (H, H)
    b_eff = (jnp.dot(beta32, w32, precision=jax.lax.Precision.HIGHEST)
             + b32).reshape(1, hidden).astype(jnp.float32)           # (1, H) f32

    bytes_x = jnp.dtype(x.dtype).itemsize
    bytes_w = jnp.dtype(matmul_dtype).itemsize
    align = _sublane_align(x.dtype)                                  # 16 for bf16 x
    vmem_budget = _vmem_budget_bytes()

    # ---- column (weight-N / output) tile ------------------------------------
    tn = _pick_col_tile(hidden, bytes_w, weight_budget=vmem_budget // 3,
                        col_tile=col_tile)
    split_residual = tn != hidden
    n_cols = hidden // tn if split_residual else 1

    # ---- row tile: conservative VMEM estimate per grid step -----------------
    def _vmem_estimate(rt_):
        est = 2 * rt_ * hidden * bytes_x                  # x tile, double-buffered
        est += 2 * rt_ * tn * bytes_x                     # output tile, double-buffered
        if split_residual:
            est += 2 * rt_ * tn * bytes_x                 # residual-column tile
            est += 2 * hidden * tn * bytes_w + 2 * tn * 4 # streamed weight/bias blocks
            est += rt_ * hidden * bytes_w                 # z scratch
        else:
            est += hidden * tn * bytes_w + tn * 4         # single-buffered weight/bias
        est += 4 * rt_ * hidden * 4 + rt_ * tn * 4        # in-kernel f32 temporaries
        return est

    if row_tile is not None:
        rt = row_tile
    elif rows <= align:
        rt = rows                                         # single full-extent block
    else:
        # Scale the row tile with hidden: ~target_row_tile_bytes of input/step.
        rt = max(align, _round_down(target_row_tile_bytes // (hidden * bytes_x), align))
        # Keep >=2 row steps so the 'parallel' axis can shard across the two
        # TensorCores on v7x (no-op on single-TC v5e/v6e).
        rt = min(rt, _round_up(pl.cdiv(rows, 2), align))
        # Shrink until the estimate fits the per-generation VMEM budget.
        while rt > align and _vmem_estimate(rt) > vmem_budget:
            rt = max(align, _round_down(rt // 2, align))

    grid = (pl.cdiv(rows, rt), n_cols)   # ragged last row block: Pallas masks it (no jnp.pad)

    # ---- block specs ---------------------------------------------------------
    x_spec = pl.BlockSpec((rt, hidden), lambda i, j: (i, 0))          # LN input (full width)
    if split_residual:
        # Weight streamed as (H, tn) column blocks (double-buffered for overlap).
        w_spec = pl.BlockSpec((hidden, tn), lambda i, j: (0, j))
        b_spec = pl.BlockSpec((1, tn), lambda i, j: (0, j))
        xcol_spec = pl.BlockSpec((rt, tn), lambda i, j: (i, j))       # residual columns
        in_specs = [x_spec, xcol_spec, w_spec, b_spec]
        args = (x2d, x2d, w_eff, b_eff)
        scratch_shapes = [pltpu.VMEM((rt, hidden), matmul_dtype)]     # cached LN output
    else:
        # Grid-invariant weight/bias: single-buffer to halve their VMEM footprint.
        w_spec = pl.BlockSpec((hidden, hidden), lambda i, j: (0, 0),
                              pipeline_mode=pl.Buffered(1))
        b_spec = pl.BlockSpec((1, hidden), lambda i, j: (0, 0),
                              pipeline_mode=pl.Buffered(1))
        in_specs = [x_spec, w_spec, b_spec]
        args = (x2d, w_eff, b_eff)
        scratch_shapes = []

    out_spec = pl.BlockSpec((rt, tn), lambda i, j: (i, j))

    kernel = functools.partial(_sublayer_connection_kernel, eps=eps,
                               approx_recip=approx_recip,
                               split_residual=split_residual)

    out2d = pl.pallas_call(
        kernel,
        out_shape=jax.ShapeDtypeStruct((rows, hidden), x.dtype),
        grid_spec=pltpu.PrefetchScalarGridSpec(
            num_scalar_prefetch=0,
            grid=grid,
            in_specs=in_specs,
            out_specs=out_spec,
            scratch_shapes=scratch_shapes,
        ),
        compiler_params=pltpu.CompilerParams(
            dimension_semantics=("parallel", "arbitrary"),
            vmem_limit_bytes=int(vmem_budget),
        ),
    )(*args)
    return out2d.reshape(orig_shape)


# ------------------------------- reference -----------------------------------

def reference(x, gamma, beta, w, b, eps=1e-6):
    """Pure-JAX f32 reference of the PyTorch module (eval mode)."""
    xf = x.astype(jnp.float32)
    mean = jnp.mean(xf, axis=-1, keepdims=True)
    var = jnp.sum((xf - mean) ** 2, axis=-1, keepdims=True) / (xf.shape[-1] - 1)
    std = jnp.sqrt(var)
    normed = gamma * (xf - mean) / (std + eps) + beta
    sub = jnp.dot(normed, w.astype(jnp.float32),
                  precision=jax.lax.Precision.HIGHEST) + b.astype(jnp.float32)
    return xf + sub


def _assert_close(name, out, ref, atol, rtol):
    out = jnp.asarray(out, jnp.float32)
    ref = jnp.asarray(ref, jnp.float32)
    err = float(jnp.max(jnp.abs(out - ref)))
    assert bool(jnp.allclose(out, ref, atol=atol, rtol=rtol)), \
        f"{name}: max abs err {err}"


# ---------------------------------- main --------------------------------------

if __name__ == "__main__":
    def make_inputs(key, batch, seq, hidden, x_dtype=jnp.float32):
        kx, kw, kb, kg, kbt = jax.random.split(key, 5)
        x = jax.random.normal(kx, (batch, seq, hidden), dtype=jnp.float32).astype(x_dtype)
        gamma = (1.0 + 0.1 * jax.random.normal(kg, (hidden,))).astype(jnp.float32)
        beta = (0.1 * jax.random.normal(kbt, (hidden,))).astype(jnp.float32)
        w = (jax.random.normal(kw, (hidden, hidden)) / jnp.sqrt(hidden)).astype(jnp.float32)
        b = (0.01 * jax.random.normal(kb, (hidden,))).astype(jnp.float32)
        return x, gamma, beta, w, b

    key = jax.random.PRNGKey(0)
    k1, k2 = jax.random.split(key)

    # 1) Small hidden, f32 matmul operands + exact reciprocal (parity flags).
    x, gamma, beta, w, b = make_inputs(k1, 2, 8, 128)
    ref = reference(x, gamma, beta, w, b)
    out = jax.block_until_ready(sublayer_connection(
        x, gamma, beta, w, b, matmul_dtype=jnp.float32, approx_recip=False))
    assert out.shape == x.shape
    _assert_close("f32 path", out, ref, atol=2e-2, rtol=2e-2)

    # 2) Default fast path: bf16 MXU operands (f32 accumulate) + EUP reciprocal.
    out = jax.block_until_ready(sublayer_connection(x, gamma, beta, w, b))
    _assert_close("bf16 path", out, ref, atol=5e-2, rtol=5e-2)

    # 3) Column-tiled weight path (forces the large-hidden code branch).
    x2, gamma2, beta2, w2, b2 = make_inputs(k2, 2, 8, 256)
    ref2 = reference(x2, gamma2, beta2, w2, b2)
    out2 = jax.block_until_ready(sublayer_connection(
        x2, gamma2, beta2, w2, b2, col_tile=128))
    _assert_close("col-tiled path", out2, ref2, atol=5e-2, rtol=5e-2)

    # 4) bf16 residual-stream activations (LN stats still f32 inside the kernel).
    x3 = x.astype(jnp.bfloat16)
    ref3 = reference(x3, gamma, beta, w, b)
    out3 = jax.block_until_ready(sublayer_connection(x3, gamma, beta, w, b))
    assert out3.dtype == jnp.bfloat16 and out3.shape == x3.shape
    _assert_close("bf16-activation path", out3, ref3, atol=1e-1, rtol=1e-1)

    print("KERNEL_OK")
</pallas_src>

<mosaic_0001>
module attributes {stable_mosaic.version = 11 : i64} {
  func.func @_sublayer_connection_kernel(%arg0: i32, %arg1: i32, %arg2: memref<8x128xf32, #tpu.memory_space<vmem>>, %arg3: memref<128x128xf32, #tpu.memory_space<vmem>>, %arg4: memref<1x128xf32, #tpu.memory_space<vmem>>, %arg5: memref<8x128xf32, #tpu.memory_space<vmem>>) attributes {dimension_semantics = [#tpu.dimension_semantics<parallel>, #tpu.dimension_semantics<arbitrary>], iteration_bounds = array<i64: 2, 1>, scalar_prefetch = 0 : i64, scratch_operands = 0 : i64, tpu.core_type = #tpu.core_type<tc>, window_params = [{transform_indices = @transform_0, window_bounds = array<i64: 8, 128>}, {pipeline_mode = #tpu.pipeline_mode<synchronous>, transform_indices = @transform_1, window_bounds = array<i64: 128, 128>}, {pipeline_mode = #tpu.pipeline_mode<synchronous>, transform_indices = @transform_2, window_bounds = array<i64: 1, 128>}, {transform_indices = @transform_3, window_bounds = array<i64: 8, 128>}]} {
    %c0 = arith.constant 0 : index
    %c0_0 = arith.constant 0 : index
    %0 = vector.load %arg2[%c0, %c0_0] : memref<8x128xf32, #tpu.memory_space<vmem>>, vector<8x128xf32>
    %cst = arith.constant dense<0.000000e+00> : vector<8xf32>
    %1 = vector.multi_reduction <add>, %0, %cst [1] : vector<8x128xf32> to vector<8xf32>
    %2 = vector.shape_cast %1 : vector<8xf32> to vector<8x1xf32>
    %cst_1 = arith.constant 1.280000e+02 : f32
    %3 = vector.broadcast %cst_1 : f32 to vector<8x1xf32>
    %4 = arith.divf %2, %3 : vector<8x1xf32>
    %5 = vector.broadcast %4 : vector<8x1xf32> to vector<8x128xf32>
    %6 = arith.subf %0, %5 : vector<8x128xf32>
    %7 = arith.mulf %6, %6 : vector<8x128xf32>
    %cst_2 = arith.constant dense<0.000000e+00> : vector<8xf32>
    %8 = vector.multi_reduction <add>, %7, %cst_2 [1] : vector<8x128xf32> to vector<8xf32>
    %9 = vector.shape_cast %8 : vector<8xf32> to vector<8x1xf32>
    %cst_3 = arith.constant 0.00787401571 : f32
    %10 = vector.broadcast %cst_3 : f32 to vector<8x1xf32>
    %11 = arith.mulf %9, %10 : vector<8x1xf32>
    %12 = math.sqrt %11 : vector<8x1xf32>
    %cst_4 = arith.constant 9.99999997E-7 : f32
    %13 = vector.broadcast %cst_4 : f32 to vector<8x1xf32>
    %14 = arith.addf %12, %13 : vector<8x1xf32>
    %cst_5 = arith.constant 1.000000e+00 : f32
    %15 = vector.broadcast %cst_5 : f32 to vector<8x1xf32>
    %16 = arith.divf %15, %14 : vector<8x1xf32>
    %17 = vector.broadcast %16 : vector<8x1xf32> to vector<8x128xf32>
    %18 = arith.mulf %6, %17 : vector<8x128xf32>
    %c0_6 = arith.constant 0 : index
    %c0_7 = arith.constant 0 : index
    %19 = vector.load %arg3[%c0_6, %c0_7] : memref<128x128xf32, #tpu.memory_space<vmem>>, vector<128x128xf32>
    %cst_8 = arith.constant dense<0.000000e+00> : vector<8x128xf32>
    %20 = tpu.matmul %18, %19, %cst_8 {dimension_numbers = #tpu.dot_dimension_numbers<[1], [0], [0], [1], [0, 0, 1, 1], [], []>} : vector<8x128xf32>, vector<128x128xf32>, vector<8x128xf32> -> vector<8x128xf32>
    %c0_9 = arith.constant 0 : index
    %c0_10 = arith.constant 0 : index
    %21 = vector.load %arg4[%c0_9, %c0_10] : memref<1x128xf32, #tpu.memory_space<vmem>>, vector<1x128xf32>
    %22 = vector.broadcast %21 : vector<1x128xf32> to vector<8x128xf32>
    %23 = arith.addf %20, %22 : vector<8x128xf32>
    %c0_11 = arith.constant 0 : index
    %c0_12 = arith.constant 0 : index
    %24 = vector.load %arg2[%c0_11, %c0_12] : memref<8x128xf32, #tpu.memory_space<vmem>>, vector<8x128xf32>
    %25 = arith.addf %24, %23 : vector<8x128xf32>
    %c0_13 = arith.constant 0 : index
    %c0_14 = arith.constant 0 : index
    %26 = vector.load %arg5[%c0_13, %c0_14] : memref<8x128xf32, #tpu.memory_space<vmem>>, vector<8x128xf32>
    tpu.vector_store %arg5[%c0_13, %c0_14], %25 {strides = array<i32>} : memref<8x128xf32, #tpu.memory_space<vmem>>, vector<8x128xf32>,
    return
  }
  func.func @transform_0(%arg0: i32, %arg1: i32) -> (i32, i32) {
    %c0_i32 = arith.constant 0 : i32
    %c0_i32_0 = arith.constant 0 : i32
    return %arg0, %c0_i32 : i32, i32
  }
  func.func @transform_1(%arg0: i32, %arg1: i32) -> (i32, i32) {
    %c0_i32 = arith.constant 0 : i32
    %c0_i32_0 = arith.constant 0 : i32
    %c0_i32_1 = arith.constant 0 : i32
    return %c0_i32, %c0_i32_0 : i32, i32
  }
  func.func @transform_2(%arg0: i32, %arg1: i32) -> (i32, i32) {
    %c0_i32 = arith.constant 0 : i32
    %c0_i32_0 = arith.constant 0 : i32
    %c0_i32_1 = arith.constant 0 : i32
    return %c0_i32, %c0_i32_0 : i32, i32
  }
  func.func @transform_3(%arg0: i32, %arg1: i32) -> (i32, i32) {
    %c0_i32 = arith.constant 0 : i32
    return %arg0, %arg1 : i32, i32
  }
}

</mosaic_0001>

<llo_original>
// kernel: tpu_custom_call.1
$region0: #{tpu_custom_call.1}
  #allocation0 [shape = 'u32[]', space=smem, size = 0x4, offset = 0x4, fixed_abs, tag = 'smem constant byte address 0x4 - core index']
  #allocation1 [shape = 'u32[144,128]{1,0:T(1,128)}', space=vmem, size = 0x12000, scoped, tag = 'internal scratch']
  %s0 = inlined_call_operand.hbm [shape: f32[16,128], index: 0, kind: input, shape index: {}]
  %s1 = inlined_call_operand.hbm [shape: f32[128,128], index: 1, kind: input, shape index: {}]
  %s2 = inlined_call_operand.vmem [shape: f32[1,128], index: 2, kind: input, shape index: {}]
  %s3 = inlined_call_operand.hbm [shape: f32[16,128], index: 3, kind: output, shape index: {}]
  %s4 = sld [smem:[#allocation0]]
  $region53: #{tpu_custom_call.1} parent=0
    _
  %s6 = ssub.s32 1, %s4
  %s7 = scalar_select 0, %s6, %s4
  $region1: #{tpu_custom_call.1} parent=0
    #allocation2 [shape = 'u8[8192]{0}', space=vmem, size = 0x2000, scoped, tag = 'input window, operand 0']
    #allocation3 [shape = 's32[2]{0}', space=sflag, size = 0x8, scoped, tag = 'scoped memory for tpu_custom_call.1']
    #allocation4 [shape = 's32[2]{0}', space=sflag, size = 0x8, scoped, tag = 'scoped memory for tpu_custom_call.1']
    #allocation5 [shape = 'u8[65536]{0}', space=vmem, size = 0x10000, scoped, tag = 'input window, operand 1, single buffered']
    #allocation6 [shape = 's32[1]{0}', space=sflag, size = 0x4, scoped, tag = 'scoped memory for tpu_custom_call.1']
    #allocation7 [shape = 'u8[8192]{0}', space=vmem, size = 0x2000, scoped, tag = 'output window, operand 0']
    %8 = vsyncpa [#allocation3], 0
    %s9 = scalar_lea.sflag [#allocation3], 1
    %10 = vsyncpa %s9, 0
    %11 = vsyncpa [#allocation6], 0
    %12 = vsyncpa [#allocation4], 0
    %s13 = scalar_lea.sflag [#allocation4], 1
    %14 = vsyncpa %s13, 0
    loop: start=0, step=1, limit=4
    $region2: #{tpu_custom_call.1} parent=1 // loop_pre_header
      _
    $region3: #{tpu_custom_call.1} parent=1 // loop_header
      %s16 = sphi 0, %s20
      %p17 = scmp.ge.s32.totalorder %s16, 4
      %s23 = sphi 0, %s35
      %s24 = sphi 0, %s31
      %s25 = sphi 0, %s23
      %s26 = sphi 0, %s24
      %s27 = sphi 0, %s25
      %s28 = sphi 0, %s26
      %s38 = sphi 0, %s40
      %s41 = sphi 0, %s38
      %s42 = sphi 0, %s41
      %s58 = sphi 0, %s42
      %s62 = sphi 0, %s62
      %s64 = sphi 0, %s62
      %s65 = sphi 0, %s64
      %s79 = sphi 0, %s65
      %s83 = sphi 0, %s83
      %s85 = sphi 0, %s83
      %s86 = sphi 0, %s85
      %s100 = sphi 0, %s86
      %s108 = sphi 0, %s110
      %s111 = sphi 0, %s108
      %s112 = sphi 0, %s111
      %s128 = sphi 0, %s112
    $region4: #{tpu_custom_call.1} parent=1 // loop_header_branch
      %19 = sbr.rel (%p17) target = $region8
    $region5: #{tpu_custom_call.1} parent=1 // loop_body
      %s21 = ssub.s32 %s16, 1
      %s22 = ssub.s32 %s16, 2
      %s29 = sadd.s32 1, %s24
      %p30 = scmp.ge.s32.totalorder %s29, 1
      %s31 = scalar_select %p30, 0, %s29
      %s32 = sadd.s32 1, %s23
      %s33 = scalar_select %p30, %s32, %s23
      %p34 = scmp.ge.s32.totalorder %s33, 2
      %s35 = scalar_select %p34, 0, %s33
      %s36 = ssub.s32 %s23, %s35
      %p37 = scmp.eq.s32.totalorder %s36, 0
      %s39 = sadd.s32 %s38, 1
      %s40 = scalar_select %p37, %s38, %s39
      %p43 = pneg %p37
      %p44 = scmp.eq.s32.totalorder %s16, 1
      %p45 = por %p43, %p44
      %p46 = scmp.ne.s32.totalorder %s38, %s41
      %p47 = scmp.eq.s32.totalorder %s16, 0
      %p48 = por %p46, %p47
      %p49 = scmp.ne.s32.totalorder %s38, %s41
      %p50 = scmp.eq.s32.totalorder %s21, 1
      %p51 = por %p49, %p50
      %p52 = scmp.ne.s32.totalorder %s41, %s42
      %p53 = scmp.eq.s32.totalorder %s21, 0
      %p54 = por %p52, %p53
      %p55 = scmp.ne.s32.totalorder %s41, %s42
      %p56 = scmp.eq.s32.totalorder %s22, 1
      %p57 = por %p55, %p56
      %p59 = scmp.ne.s32.totalorder %s42, %s58
      %p60 = scmp.eq.s32.totalorder %s22, 0
      %p61 = por %p59, %p60
      %s63 = sadd.s32 %s62, 1
      %p66 = scmp.eq.s32.totalorder %s16, 1
      %p67 = scmp.ne.s32.totalorder %s62, %s64
      %p68 = scmp.eq.s32.totalorder %s16, 0
      %p69 = por %p67, %p68
      %p70 = scmp.ne.s32.totalorder %s62, %s64
      %p71 = scmp.eq.s32.totalorder %s21, 1
      %p72 = por %p70, %p71
      %p73 = scmp.ne.s32.totalorder %s64, %s65
      %p74 = scmp.eq.s32.totalorder %s21, 0
      %p75 = por %p73, %p74
      %p76 = scmp.ne.s32.totalorder %s64, %s65
      %p77 = scmp.eq.s32.totalorder %s22, 1
      %p78 = por %p76, %p77
      %p80 = scmp.ne.s32.totalorder %s65, %s79
      %p81 = scmp.eq.s32.totalorder %s22, 0
      %p82 = por %p80, %p81
      %s84 = sadd.s32 %s83, 1
      %p87 = scmp.eq.s32.totalorder %s16, 1
      %p88 = scmp.ne.s32.totalorder %s83, %s85
      %p89 = scmp.eq.s32.totalorder %s16, 0
      %p90 = por %p88, %p89
      %p91 = scmp.ne.s32.totalorder %s83, %s85
      %p92 = scmp.eq.s32.totalorder %s21, 1
      %p93 = por %p91, %p92
      %p94 = scmp.ne.s32.totalorder %s85, %s86
      %p95 = scmp.eq.s32.totalorder %s21, 0
      %p96 = por %p94, %p95
      %p97 = scmp.ne.s32.totalorder %s85, %s86
      %p98 = scmp.eq.s32.totalorder %s22, 1
      %p99 = por %p97, %p98
      %p101 = scmp.ne.s32.totalorder %s86, %s100
      %p102 = scmp.eq.s32.totalorder %s22, 0
      %p103 = por %p101, %p102
      %s104 = ssub.s32 %s23, %s35
      %s105 = ssub.s32 %s24, %s31
      %s106 = sor.u32 %s104, %s105
      %p107 = scmp.eq.s32.totalorder %s106, 0
      %s109 = sadd.s32 %s108, 1
      %s110 = scalar_select %p107, %s108, %s109
      %p113 = pneg %p107
      %p114 = scmp.eq.s32.totalorder %s16, 1
      %p115 = por %p113, %p114
      %p116 = scmp.ne.s32.totalorder %s108, %s111
      %p117 = scmp.eq.s32.totalorder %s16, 0
      %p118 = por %p116, %p117
      %p119 = scmp.ne.s32.totalorder %s108, %s111
      %p120 = scmp.eq.s32.totalorder %s21, 1
      %p121 = por %p119, %p120
      %p122 = scmp.ne.s32.totalorder %s111, %s112
      %p123 = scmp.eq.s32.totalorder %s21, 0
      %p124 = por %p122, %p123
      %p125 = scmp.ne.s32.totalorder %s111, %s112
      %p126 = scmp.eq.s32.totalorder %s22, 1
      %p127 = por %p125, %p126
      %p129 = scmp.ne.s32.totalorder %s112, %s128
      %p130 = scmp.eq.s32.totalorder %s22, 0
      %p131 = por %p129, %p130
      %p132 = scmp.le.s32.totalorder 1, %s16
      %p133 = scmp.lt.s32.totalorder %s16, 3
      %p134 = pnand %p132, %p133
      %p135 = pneg %p134
      // Predicated region
      $region9: #{tpu_custom_call.1} parent=5 // pred_check
        _
      $region10: #{tpu_custom_call.1} parent=5 // pred_check_branch
        %137 = sbr.rel (%p134) target = $region12
      $region11: #{tpu_custom_call.1} parent=5 // pred_region
        %s138 = ssub.s32 %s16, 1
        // Predicated region
        $region13: #{tpu_custom_call.1} parent=11 // pred_check
          %p139 = pneg %p75
        $region14: #{tpu_custom_call.1} parent=11 // pred_check_branch
          %141 = sbr.rel (%p139) target = $region16
        $region15: #{tpu_custom_call.1} parent=11 // pred_region
          %s143 = ssub.s32 2048, 2048
          %144 = vsyncadd [#allocation6], %s143
          %s145 = sshll.u32 [#allocation5], 4
          %s146 = int_to_ptr.vmem [resolvable:$true] %s145
          %151 = dma.hbm_to_vmem [thread:$0]  %s1, 2048, %s146, [#allocation6], 128, 128, 8
        $region16: #{tpu_custom_call.1} parent=11 // pred_fallthru
          _
        // Predicated region
        $region17: #{tpu_custom_call.1} parent=11 // pred_check
          %p152 = pneg %p96
        $region18: #{tpu_custom_call.1} parent=11 // pred_check_branch
          %154 = sbr.rel (%p152) target = $region20
        $region19: #{tpu_custom_call.1} parent=11 // pred_region
          _
        $region20: #{tpu_custom_call.1} parent=11 // pred_fallthru
          _
      $region12: #{tpu_custom_call.1} parent=5 // pred_fallthru
        _
      %p155 = scmp.lt.s32.totalorder %s16, 2
      // Predicated region
      $region21: #{tpu_custom_call.1} parent=5 // pred_check
        %p156 = pneg %p155
      $region22: #{tpu_custom_call.1} parent=5 // pred_check_branch
        %158 = sbr.rel (%p156) target = $region24
      $region23: #{tpu_custom_call.1} parent=5 // pred_region
        // Predicated region
        $region25: #{tpu_custom_call.1} parent=23 // pred_check
          %p159 = pneg %p48
        $region26: #{tpu_custom_call.1} parent=23 // pred_check_branch
          %161 = sbr.rel (%p159) target = $region28
        $region27: #{tpu_custom_call.1} parent=23 // pred_region
          %s162 = sand.u32 %s38, 1
          %s163 = scalar_lea.sflag [#allocation3], %s162
          %s164 = sand.u32 %s38, 1
          %s165 = smul.addr %s164, 8
          %s166 = scalar_lea.vmem [#allocation2], %s165
          %s168 = ssub.s32 128, 128
          %169 = vsyncadd %s163, %s168
          %s170 = smul.addr %s23, 128
          %s171 = scalar_lea.hbm %s0, %s170
          %s173 = sshll.u32 %s166, 4
          %s174 = int_to_ptr.vmem [resolvable:$true] %s173
          %176 = dma.hbm_to_vmem [thread:$0]  %s171, 128, %s174, %s163
        $region28: #{tpu_custom_call.1} parent=23 // pred_fallthru
          _
      $region24: #{tpu_custom_call.1} parent=5 // pred_fallthru
        _
      %p177 = scmp.le.s32.totalorder 1, %s16
      %p178 = scmp.lt.s32.totalorder %s16, 3
      %p179 = pnand %p177, %p178
      %p180 = pneg %p179
      // Predicated region
      $region29: #{tpu_custom_call.1} parent=5 // pred_check
        _
      $region30: #{tpu_custom_call.1} parent=5 // pred_check_branch
        %182 = sbr.rel (%p179) target = $region32
      $region31: #{tpu_custom_call.1} parent=5 // pred_region
        %s183 = ssub.s32 %s16, 1
        %s184 = sand.u32 %s41, 1
        %s185 = scalar_lea.sflag [#allocation3], %s184
        %s186 = sand.u32 %s41, 1
        %s187 = smul.addr %s186, 8
        %s188 = scalar_lea.vmem [#allocation2], %s187
        // Predicated region
        $region33: #{tpu_custom_call.1} parent=31 // pred_check
          %p189 = pneg %p54
        $region34: #{tpu_custom_call.1} parent=31 // pred_check_branch
          %191 = sbr.rel (%p189) target = $region36
        $region35: #{tpu_custom_call.1} parent=31 // pred_region
          %192 = dma.done %s185, 128
        $region36: #{tpu_custom_call.1} parent=31 // pred_fallthru
          _
        // Predicated region
        $region37: #{tpu_custom_call.1} parent=31 // pred_check
          %p193 = pneg %p75
        $region38: #{tpu_custom_call.1} parent=31 // pred_check_branch
          %195 = sbr.rel (%p193) target = $region40
        $region39: #{tpu_custom_call.1} parent=31 // pred_region
          %196 = dma.done [#allocation6], 2048
        $region40: #{tpu_custom_call.1} parent=31 // pred_fallthru
          _
        %s197 = sand.u32 %s41, 1
        %s198 = scalar_lea.sflag [#allocation3], %s197
        %s199 = sand.u32 %s41, 1
        %s200 = smul.addr %s199, 8
        %s201 = scalar_lea.vmem [#allocation2], %s200
        %p202 = pneg %p54
        %p203 = pneg %p51
        %p204 = pneg %p75
        %p205 = pneg %p72
        %p206 = pneg %p96
        %p207 = pneg %p93
        %p208 = pneg %p124
        %p209 = pneg %p121
        %s210 = sand.u32 %s111, 1
        %s211 = scalar_lea.sflag [#allocation4], %s210
        %s212 = sand.u32 %s111, 1
        %s213 = smul.addr %s212, 8
        %s214 = scalar_lea.vmem [#allocation7], %s213
        %v215 = vld [vmem:[%s188] sm:$0xff]
        %216 = vadd.xlane.f32.xlu0 %v215
        %v217 = vpop.xlane.xlu0 %216
        %v218 = vrcp.pop 128.0
        %v219 = vmul.f32 %v217, %v218
        %v220 = vsub.f32 %v215, %v219
        %v221 = vmul.f32 %v220, %v220
        %222 = vadd.xlane.f32.xlu0 %v221
        %v223 = vpop.xlane.xlu0 %222
        %v224 = vmul.f32 %v223, 0.007874016
        %v225 = vrsqrt.pop %v224
        %v226 = vmul.f32 %v224, %v225
        %vm227 = vcmp.eq.f32.partialorder %v224, inf
        %v228 = vsel %vm227, %v224, %v226
        %vm229 = vcmp.eq.f32.partialorder %v224, 0.0
        %v230 = vand.u32 %v224, 2147483648
        %v231 = vsel %vm229, %v230, %v228
        %v232 = vadd.f32 %v231, 1e-06
        %v233 = vrcp.pop %v232
        %v234 = vmul.f32 1.0, %v233
        %v235 = vmul.f32 %v220, %v234
        %v236 = vld [vmem:[#allocation5] sm:$0xff]
        %v237 = vld [vmem:[#allocation5 + $0x8] sm:$0xff]
        %v238 = vld [vmem:[#allocation5 + $0x10] sm:$0xff]
        %v239 = vld [vmem:[#allocation5 + $0x18] sm:$0xff]
        %v240 = vld [vmem:[#allocation5 + $0x20] sm:$0xff]
        %v241 = vld [vmem:[#allocation5 + $0x28] sm:$0xff]
        %v242 = vld [vmem:[#allocation5 + $0x30] sm:$0xff]
        %v243 = vld [vmem:[#allocation5 + $0x38] sm:$0xff]
        %v244 = vld [vmem:[#allocation5 + $0x40] sm:$0xff]
        %v245 = vld [vmem:[#allocation5 + $0x48] sm:$0xff]
        %v246 = vld [vmem:[#allocation5 + $0x50] sm:$0xff]
        %v247 = vld [vmem:[#allocation5 + $0x58] sm:$0xff]
        %v248 = vld [vmem:[#allocation5 + $0x60] sm:$0xff]
        %v249 = vld [vmem:[#allocation5 + $0x68] sm:$0xff]
        %v250 = vld [vmem:[#allocation5 + $0x70] sm:$0xff]
        %v251 = vld [vmem:[#allocation5 + $0x78] sm:$0xff]
        %v252 = vld [vmem:[%s2] sm:$0x1]
        %v254 = vlaneseq
        %v255 = vshrl.u32 %v254, 7
        %v256 = vsub.s32 0, %v255
        %v257 = vrot.slane %v252, %v256
        %259 = vmatprep.subr.mxu0 0.0
        %260 = vmatpush1.msra.mxu0 %v236
        %261 = vmatprep.subr.mxu0 0.0
        %262 = vmatpush1.msra.mxu0 %v237
        %263 = vmatprep.subr.mxu0 0.0
        %264 = vmatpush1.msra.mxu0 %v238
        %265 = vmatprep.subr.mxu0 0.0
        %266 = vmatpush1.msra.mxu0 %v239
        %267 = vmatprep.subr.mxu0 0.0
        %268 = vmatpush1.msra.mxu0 %v240
        %269 = vmatprep.subr.mxu0 0.0
        %270 = vmatpush1.msra.mxu0 %v241
        %271 = vmatprep.subr.mxu0 0.0
        %272 = vmatpush1.msra.mxu0 %v242
        %273 = vmatprep.subr.mxu0 0.0
        %274 = vmatpush1.msra.mxu0 %v243
        %275 = vmatprep.subr.mxu0 0.0
        %276 = vmatpush1.msra.mxu0 %v244
        %277 = vmatprep.subr.mxu0 0.0
        %278 = vmatpush1.msra.mxu0 %v245
        %279 = vmatprep.subr.mxu0 0.0
        %280 = vmatpush1.msra.mxu0 %v246
        %281 = vmatprep.subr.mxu0 0.0
        %282 = vmatpush1.msra.mxu0 %v247
        %283 = vmatprep.subr.mxu0 0.0
        %284 = vmatpush1.msra.mxu0 %v248
        %285 = vmatprep.subr.mxu0 0.0
        %286 = vmatpush1.msra.mxu0 %v249
        %287 = vmatprep.subr.mxu0 0.0
        %288 = vmatpush1.msra.mxu0 %v250
        %289 = vmatprep.subr.mxu0 0.0
        %290 = vmatpush1.msra.mxu0 %v251
        %291 = vmatprep.subr.mxu0 0.0
        %292 = vmatpush1.msra.mxu0 0.0
        %293 = vmatprep.subr.mxu0 0.0
        %294 = vmatpush1.msra.mxu0 0.0
        %295 = vmatprep.subr.mxu0 0.0
        %296 = vmatpush1.msra.mxu0 0.0
        %297 = vmatprep.subr.mxu0 0.0
        %298 = vmatpush1.msra.mxu0 0.0
        %299 = vmatprep.subr.mxu0 0.0
        %300 = vmatpush1.msra.mxu0 0.0
        %301 = vmatprep.subr.mxu0 0.0
        %302 = vmatpush1.msra.mxu0 0.0
        %303 = vmatprep.subr.mxu0 0.0
        %304 = vmatpush1.msra.mxu0 0.0
        %305 = vmatprep.subr.mxu0 0.0
        %306 = vmatpush1.msra.mxu0 0.0
        %307 = vmatprep.subr.mxu0 0.0
        %308 = vmatpush1.msra.mxu0 0.0
        %309 = vmatprep.subr.mxu0 0.0
        %310 = vmatpush1.msra.mxu0 0.0
        %311 = vmatprep.subr.mxu0 0.0
        %312 = vmatpush1.msra.mxu0 0.0
        %313 = vmatprep.subr.mxu0 0.0
        %314 = vmatpush1.msra.mxu0 0.0
        %315 = vmatprep.subr.mxu0 0.0
        %316 = vmatpush1.msra.mxu0 0.0
        %317 = vmatprep.subr.mxu0 0.0
        %318 = vmatpush1.msra.mxu0 0.0
        %319 = vmatprep.subr.mxu0 0.0
        %320 = vmatpush1.msra.mxu0 0.0
        %321 = vmatprep.subr.mxu0 0.0
        %322 = vmatpush1.msra.mxu0 0.0
        %323 = vmatprep.mubr.f32.mxu0 0.0
        %324 = vmatmul.mubr.f32.gmra.mrb[0].mxu0 %v235
        %v325 = vpop.f32.mrb[0].mxu0
        %v326 = vadd.f32 %v257, %v325
        %v327 = vpop.f32.mrb[0].mxu0
        %328 = vdwg.mxu0
        %v329 = vadd.f32 %v215, %v326
        %330 = vst [vmem:[%s214] sm:$0xff] %v329
        %s331 = sand.u32 %s111, 1
        %s332 = scalar_lea.sflag [#allocation4], %s331
        %s333 = sand.u32 %s111, 1
        %s334 = smul.addr %s333, 8
        %s335 = scalar_lea.vmem [#allocation7], %s334
        // Predicated region
        $region41: #{tpu_custom_call.1} parent=31 // pred_check
          %p336 = pneg %p121
        $region42: #{tpu_custom_call.1} parent=31 // pred_check_branch
          %338 = sbr.rel (%p336) target = $region44
        $region43: #{tpu_custom_call.1} parent=31 // pred_region
          %s340 = ssub.s32 128, 128
          %341 = vsyncadd %s332, %s340
          %s342 = sadd.s32 %s26, %s25
          %s343 = smul.addr %s342, 128
          %s344 = scalar_lea.hbm %s3, %s343
          %s346 = sshll.u32 %s335, 4
          %s347 = int_to_ptr.vmem [resolvable:$true] %s346
          %349 = dma.vmem_to_hbm [thread:$0]  %s347, 128, %s344, %s332
        $region44: #{tpu_custom_call.1} parent=31 // pred_fallthru
          _
      $region32: #{tpu_custom_call.1} parent=5 // pred_fallthru
        _
      %p350 = scmp.le.s32.totalorder 2, %s16
      // Predicated region
      $region45: #{tpu_custom_call.1} parent=5 // pred_check
        %p351 = pneg %p350
      $region46: #{tpu_custom_call.1} parent=5 // pred_check_branch
        %353 = sbr.rel (%p351) target = $region48
      $region47: #{tpu_custom_call.1} parent=5 // pred_region
        %s354 = ssub.s32 %s16, 2
        // Predicated region
        $region49: #{tpu_custom_call.1} parent=47 // pred_check
          %p355 = pneg %p127
        $region50: #{tpu_custom_call.1} parent=47 // pred_check_branch
          %357 = sbr.rel (%p355) target = $region52
        $region51: #{tpu_custom_call.1} parent=47 // pred_region
          %s358 = sand.u32 %s112, 1
          %s359 = scalar_lea.sflag [#allocation4], %s358
          %s360 = sand.u32 %s112, 1
          %s361 = smul.addr %s360, 8
          %s362 = scalar_lea.vmem [#allocation7], %s361
          %363 = dma.done %s359, 128
        $region52: #{tpu_custom_call.1} parent=47 // pred_fallthru
          _
      $region48: #{tpu_custom_call.1} parent=5 // pred_fallthru
        _
    $region6: #{tpu_custom_call.1} parent=1 // loop_footer
      %s20 = sadd.s32 1, %s16
    $region7: #{tpu_custom_call.1} parent=1 // loop_footer_branch
      %15 = sbr.rel target = $region3
    $region8: #{tpu_custom_call.1} parent=1 // loop_exit
      _
    %364 = vsyncpa [#allocation3], 1
    %s365 = scalar_lea.sflag [#allocation3], 1
    %366 = vsyncpa %s365, 1
    %367 = vsyncpa [#allocation6], 1
    %368 = vsyncpa [#allocation4], 1
    %s369 = scalar_lea.sflag [#allocation4], 1
    %370 = vsyncpa %s369, 1

</llo_original>
